<compile_context>
chip_gen: v6e
topology: v6e:2x2x1
jax: 0.10.0
libtpu: 0.0.40
codegen_flags: <defaults>
</compile_context>

<pallas_src>
import jax
import jax.numpy as jnp
from jax.experimental import pallas as pl
from jax.experimental.pallas import tpu as pltpu


def _lora_ffn_kernel(x_ref, w_ref, bias_ref, xa_ref, lb_ref, o_ref, acc_ref):
    k = pl.program_id(2)

    @pl.when(k == 0)
    def _init():
        acc_ref[...] = jnp.zeros_like(acc_ref)

    # Main MXU accumulate: bf16 tiles, f32 accumulator.
    acc_ref[...] += jnp.dot(
        x_ref[...], w_ref[...], preferred_element_type=jnp.float32
    )

    @pl.when(k == pl.num_programs(2) - 1)
    def _finalize():
        # LoRA term: (tm, r) @ (r, tn); mask & scaling already folded into xa.
        lora = jnp.dot(xa_ref[...], lb_ref[...], preferred_element_type=jnp.float32)
        o_ref[...] = (acc_ref[...] + bias_ref[...] + lora).astype(o_ref.dtype)


def _pick_tile(dim, target):
    """Full extent for small dims; otherwise the requested tile (must divide)."""
    if dim <= target:
        return dim
    assert dim % target == 0, f"dim {dim} must be a multiple of tile {target}"
    return target


def lora_forward(x, w_ffn, b_ffn, w_a, w_b, im_mask, lora_scaling,
                 *, tm=256, tn=512, tk=512):
    """x: (B, S, Din) f32, im_mask: (B, S) bool or None -> (B, S, Dout) f32.

    Weights are in "input-major" layout: w_ffn (Din, Dout), w_a (Din, r),
    w_b (r, Dout), b_ffn (Dout,).
    """
    B, S, Din = x.shape
    Dout = w_ffn.shape[1]
    r = w_a.shape[1]
    N = B * S

    x2 = x.reshape(N, Din).astype(jnp.float32)
    if im_mask is None:
        mask2 = jnp.zeros((N, 1), jnp.float32)
    else:
        mask2 = im_mask.reshape(N, 1).astype(jnp.float32)

    # Hoisted rank-r projection; fold per-row mask and the LoRA scale into it.
    # TODO(synk): nn.Dropout treated as identity (eval-mode semantics).
    xa = (x2 @ w_a.astype(jnp.float32)) * (mask2 * jnp.float32(lora_scaling))

    # Tile sizes (re-derived for the small demo; defaults sized for 64 MiB VMEM).
    tm = _pick_tile(N, tm)
    tn = _pick_tile(Dout, tn)
    tk = _pick_tile(Din, tk)
    grid = (N // tm, Dout // tn, Din // tk)

    # bf16 MXU feed for the big matmul; everything else stays f32.
    x_bf = x2.astype(jnp.bfloat16)
    w_bf = w_ffn.astype(jnp.bfloat16)
    bias2 = b_ffn.reshape(1, Dout).astype(jnp.float32)
    lb = w_b.astype(jnp.float32)

    flops = 2 * N * Din * Dout + 2 * N * r * Dout
    bytes_accessed = (x_bf.size * 2 + w_bf.size * 2 + bias2.size * 4
                      + xa.size * 4 + lb.size * 4 + N * Dout * 4)

    out = pl.pallas_call(
        _lora_ffn_kernel,
        out_shape=jax.ShapeDtypeStruct((N, Dout), jnp.float32),
        grid_spec=pltpu.PrefetchScalarGridSpec(
            num_scalar_prefetch=0,
            grid=grid,
            in_specs=[
                pl.BlockSpec((tm, tk), lambda i, j, k: (i, k)),   # x
                pl.BlockSpec((tk, tn), lambda i, j, k: (k, j)),   # W_ffn
                pl.BlockSpec((1, tn), lambda i, j, k: (0, j)),    # bias
                pl.BlockSpec((tm, r), lambda i, j, k: (i, 0)),    # xa (masked, scaled)
                pl.BlockSpec((r, tn), lambda i, j, k: (0, j)),    # lora_B
            ],
            out_specs=pl.BlockSpec((tm, tn), lambda i, j, k: (i, j)),
            scratch_shapes=[pltpu.VMEM((tm, tn), jnp.float32)],
        ),
        compiler_params=pltpu.CompilerParams(
            dimension_semantics=("parallel", "parallel", "arbitrary"),
            vmem_limit_bytes=48 * 1024 * 1024,
        ),
        cost_estimate=pl.CostEstimate(
            flops=flops, transcendentals=0, bytes_accessed=bytes_accessed
        ),
    )(x_bf, w_bf, bias2, xa, lb)

    return out.reshape(B, S, Dout)


if __name__ == "__main__":
    # Module hyperparameters (small, consistent with the forward)
    batch, seq = 2, 8
    in_features, out_features = 32, 32
    lora_r, lora_alpha = 8, 16
    lora_scaling = lora_alpha / lora_r

    key = jax.random.PRNGKey(0)
    kx, km, kffn, kb, ka, kB = jax.random.split(key, 6)

    x = jax.random.normal(kx, (batch, seq, in_features), dtype=jnp.float32)
    im_mask = jax.random.bernoulli(km, 0.5, (batch, seq))

    # Stored in (in, out) layout == W^T of PyTorch's nn.Linear weight.
    w_ffn = jax.random.normal(kffn, (in_features, out_features), jnp.float32) * 0.05
    b_ffn = jax.random.normal(kb, (out_features,), jnp.float32) * 0.05
    w_a = jax.random.normal(ka, (in_features, lora_r), jnp.float32) * 0.05
    w_b = jax.random.normal(kB, (lora_r, out_features), jnp.float32) * 0.05

    out = lora_forward(x, w_ffn, b_ffn, w_a, w_b, im_mask, lora_scaling)
    out = jax.block_until_ready(out)

    # Pure-JAX f32 reference (kernel feeds the MXU bf16 -> loosened tolerance,
    # f32 accumulation bounds the error).
    ref = x @ w_ffn + b_ffn
    lora = ((x @ w_a) @ w_b) * lora_scaling
    ref = ref + im_mask[..., None].astype(jnp.float32) * lora
    assert out.shape == ref.shape
    assert jnp.allclose(out, ref, atol=3e-2, rtol=3e-2), (
        f"max abs diff {jnp.max(jnp.abs(out - ref))}"
    )

    print("KERNEL_OK")
</pallas_src>

<mosaic_0001>
module attributes {stable_mosaic.version = 11 : i64} {
  func.func @_lora_ffn_kernel(%arg0: i32, %arg1: i32, %arg2: i32, %arg3: memref<16x32xbf16, #tpu.memory_space<vmem>>, %arg4: memref<32x32xbf16, #tpu.memory_space<vmem>>, %arg5: memref<1x32xf32, #tpu.memory_space<vmem>>, %arg6: memref<16x8xf32, #tpu.memory_space<vmem>>, %arg7: memref<8x32xf32, #tpu.memory_space<vmem>>, %arg8: memref<16x32xf32, #tpu.memory_space<vmem>>, %arg9: memref<16x32xf32, #tpu.memory_space<vmem>>) attributes {dimension_semantics = [#tpu.dimension_semantics<parallel>, #tpu.dimension_semantics<parallel>, #tpu.dimension_semantics<arbitrary>], iteration_bounds = array<i64: 1, 1, 1>, scalar_prefetch = 0 : i64, scratch_operands = 1 : i64, tpu.core_type = #tpu.core_type<tc>, window_params = [{transform_indices = @transform_0, window_bounds = array<i64: 16, 32>}, {transform_indices = @transform_1, window_bounds = array<i64: 32, 32>}, {transform_indices = @transform_2, window_bounds = array<i64: 1, 32>}, {transform_indices = @transform_3, window_bounds = array<i64: 16, 8>}, {transform_indices = @transform_4, window_bounds = array<i64: 8, 32>}, {transform_indices = @transform_5, window_bounds = array<i64: 16, 32>}]} {
    %c0_i32 = arith.constant 0 : i32
    %0 = arith.cmpi eq, %arg2, %c0_i32 : i32
    %1 = arith.extui %0 : i1 to i32
    %c0_i32_0 = arith.constant 0 : i32
    %2 = arith.cmpi ne, %1, %c0_i32_0 : i32
    scf.if %2 {
      %cst_10 = arith.constant 0.000000e+00 : f32
      %12 = vector.broadcast %cst_10 : f32 to vector<16x32xf32>
      %c0_11 = arith.constant 0 : index
      %c0_12 = arith.constant 0 : index
      %13 = vector.load %arg9[%c0_11, %c0_12] : memref<16x32xf32, #tpu.memory_space<vmem>>, vector<16x32xf32>
      tpu.vector_store %arg9[%c0_11, %c0_12], %12 {strides = array<i32>} : memref<16x32xf32, #tpu.memory_space<vmem>>, vector<16x32xf32>,
    } else {
    }
    %c0 = arith.constant 0 : index
    %c0_1 = arith.constant 0 : index
    %3 = vector.load %arg9[%c0, %c0_1] : memref<16x32xf32, #tpu.memory_space<vmem>>, vector<16x32xf32>
    %c0_2 = arith.constant 0 : index
    %c0_3 = arith.constant 0 : index
    %4 = vector.load %arg3[%c0_2, %c0_3] : memref<16x32xbf16, #tpu.memory_space<vmem>>, vector<16x32xbf16>
    %c0_4 = arith.constant 0 : index
    %c0_5 = arith.constant 0 : index
    %5 = vector.load %arg4[%c0_4, %c0_5] : memref<32x32xbf16, #tpu.memory_space<vmem>>, vector<32x32xbf16>
    %cst = arith.constant dense<0.000000e+00> : vector<16x32xf32>
    %6 = tpu.matmul %4, %5, %cst {dimension_numbers = #tpu.dot_dimension_numbers<[1], [0], [0], [1], [0, 0, 1, 1], [], []>} : vector<16x32xbf16>, vector<32x32xbf16>, vector<16x32xf32> -> vector<16x32xf32>
    %7 = arith.addf %3, %6 : vector<16x32xf32>
    %c0_6 = arith.constant 0 : index
    %c0_7 = arith.constant 0 : index
    %8 = vector.load %arg9[%c0_6, %c0_7] : memref<16x32xf32, #tpu.memory_space<vmem>>, vector<16x32xf32>
    tpu.vector_store %arg9[%c0_6, %c0_7], %7 {strides = array<i32>} : memref<16x32xf32, #tpu.memory_space<vmem>>, vector<16x32xf32>,
    %c0_i32_8 = arith.constant 0 : i32
    %9 = arith.cmpi eq, %arg2, %c0_i32_8 : i32
    %10 = arith.extui %9 : i1 to i32
    %c0_i32_9 = arith.constant 0 : i32
    %11 = arith.cmpi ne, %10, %c0_i32_9 : i32
    scf.if %11 {
      %c0_10 = arith.constant 0 : index
      %c0_11 = arith.constant 0 : index
      %12 = vector.load %arg6[%c0_10, %c0_11] : memref<16x8xf32, #tpu.memory_space<vmem>>, vector<16x8xf32>
      %c0_12 = arith.constant 0 : index
      %c0_13 = arith.constant 0 : index
      %13 = vector.load %arg7[%c0_12, %c0_13] : memref<8x32xf32, #tpu.memory_space<vmem>>, vector<8x32xf32>
      %cst_14 = arith.constant dense<0.000000e+00> : vector<16x32xf32>
      %14 = tpu.matmul %12, %13, %cst_14 {dimension_numbers = #tpu.dot_dimension_numbers<[1], [0], [0], [1], [0, 0, 1, 1], [], []>} : vector<16x8xf32>, vector<8x32xf32>, vector<16x32xf32> -> vector<16x32xf32>
      %c0_15 = arith.constant 0 : index
      %c0_16 = arith.constant 0 : index
      %15 = vector.load %arg9[%c0_15, %c0_16] : memref<16x32xf32, #tpu.memory_space<vmem>>, vector<16x32xf32>
      %c0_17 = arith.constant 0 : index
      %c0_18 = arith.constant 0 : index
      %16 = vector.load %arg5[%c0_17, %c0_18] : memref<1x32xf32, #tpu.memory_space<vmem>>, vector<1x32xf32>
      %17 = vector.broadcast %16 : vector<1x32xf32> to vector<16x32xf32>
      %18 = arith.addf %15, %17 : vector<16x32xf32>
      %19 = arith.addf %18, %14 : vector<16x32xf32>
      %c0_19 = arith.constant 0 : index
      %c0_20 = arith.constant 0 : index
      %20 = vector.load %arg8[%c0_19, %c0_20] : memref<16x32xf32, #tpu.memory_space<vmem>>, vector<16x32xf32>
      tpu.vector_store %arg8[%c0_19, %c0_20], %19 {strides = array<i32>} : memref<16x32xf32, #tpu.memory_space<vmem>>, vector<16x32xf32>,
    } else {
    }
    return
  }
  func.func @transform_0(%arg0: i32, %arg1: i32, %arg2: i32) -> (i32, i32) {
    %c0_i32 = arith.constant 0 : i32
    return %arg0, %arg2 : i32, i32
  }
  func.func @transform_1(%arg0: i32, %arg1: i32, %arg2: i32) -> (i32, i32) {
    %c0_i32 = arith.constant 0 : i32
    return %arg2, %arg1 : i32, i32
  }
  func.func @transform_2(%arg0: i32, %arg1: i32, %arg2: i32) -> (i32, i32) {
    %c0_i32 = arith.constant 0 : i32
    %c0_i32_0 = arith.constant 0 : i32
    return %c0_i32, %arg1 : i32, i32
  }
  func.func @transform_3(%arg0: i32, %arg1: i32, %arg2: i32) -> (i32, i32) {
    %c0_i32 = arith.constant 0 : i32
    %c0_i32_0 = arith.constant 0 : i32
    return %arg0, %c0_i32 : i32, i32
  }
  func.func @transform_4(%arg0: i32, %arg1: i32, %arg2: i32) -> (i32, i32) {
    %c0_i32 = arith.constant 0 : i32
    %c0_i32_0 = arith.constant 0 : i32
    return %c0_i32, %arg1 : i32, i32
  }
  func.func @transform_5(%arg0: i32, %arg1: i32, %arg2: i32) -> (i32, i32) {
    %c0_i32 = arith.constant 0 : i32
    return %arg0, %arg1 : i32, i32
  }
}

</mosaic_0001>

<llo_original>
// kernel: tpu_custom_call.1
$region0: #{tpu_custom_call.1}
  #allocation0 [shape = 'u32[]', space=smem, size = 0x4, offset = 0x4, fixed_abs, tag = 'smem constant byte address 0x4 - core index']
  #allocation1 [shape = 'u32[144,128]{1,0:T(1,128)}', space=vmem, size = 0x12000, scoped, tag = 'internal scratch']
  #allocation2 [shape = 'f32[16,32]{1,0:T(8,128)}', space=vmem, size = 0x2000, scoped, tag = 'scratch operand']
  %s0 = inlined_call_operand.vmem [shape: bf16[16,32], index: 0, kind: input, shape index: {}]
  %s1 = inlined_call_operand.vmem [shape: bf16[32,32], index: 1, kind: input, shape index: {}]
  %s2 = inlined_call_operand.vmem [shape: f32[1,32], index: 2, kind: input, shape index: {}]
  %s3 = inlined_call_operand.vmem [shape: f32[16,8], index: 3, kind: input, shape index: {}]
  %s4 = inlined_call_operand.hbm [shape: f32[8,32], index: 4, kind: input, shape index: {}]
  %s5 = inlined_call_operand.hbm [shape: f32[16,32], index: 5, kind: output, shape index: {}]
  %s6 = sld [smem:[#allocation0]]
  $region42: #{tpu_custom_call.1} parent=0
    _
  %s8 = ssub.s32 1, %s6
  %s9 = scalar_select 0, %s8, %s6
  $region1: #{tpu_custom_call.1} parent=0
    #allocation3 [shape = 'u8[4096]{0}', space=vmem, size = 0x1000, scoped, tag = 'input window, operand 4, single buffered']
    #allocation4 [shape = 's32[1]{0}', space=sflag, size = 0x4, scoped, tag = 'scoped memory for tpu_custom_call.1']
    #allocation5 [shape = 's32[1]{0}', space=sflag, size = 0x4, scoped, tag = 'scoped memory for tpu_custom_call.1']
    #allocation6 [shape = 'u8[8192]{0}', space=vmem, size = 0x2000, scoped, tag = 'output window, operand 0, single buffered']
    %10 = vsyncpa [#allocation4], 0
    %11 = vsyncpa [#allocation5], 0
    // Predicated region
    $region2: #{tpu_custom_call.1} parent=1 // pred_check
      _
    $region3: #{tpu_custom_call.1} parent=1 // pred_check_branch
      %13 = sbr.rel (0) target = $region5
    $region4: #{tpu_custom_call.1} parent=1 // pred_region
      _
    $region5: #{tpu_custom_call.1} parent=1 // pred_fallthru
      _
    // Predicated region
    $region6: #{tpu_custom_call.1} parent=1 // pred_check
      _
    $region7: #{tpu_custom_call.1} parent=1 // pred_check_branch
      %15 = sbr.rel (0) target = $region9
    $region8: #{tpu_custom_call.1} parent=1 // pred_region
      _
    $region9: #{tpu_custom_call.1} parent=1 // pred_fallthru
      _
    // Predicated region
    $region10: #{tpu_custom_call.1} parent=1 // pred_check
      _
    $region11: #{tpu_custom_call.1} parent=1 // pred_check_branch
      %17 = sbr.rel (0) target = $region13
    $region12: #{tpu_custom_call.1} parent=1 // pred_region
      _
    $region13: #{tpu_custom_call.1} parent=1 // pred_fallthru
      _
    // Predicated region
    $region14: #{tpu_custom_call.1} parent=1 // pred_check
      _
    $region15: #{tpu_custom_call.1} parent=1 // pred_check_branch
      %19 = sbr.rel (0) target = $region17
    $region16: #{tpu_custom_call.1} parent=1 // pred_region
      _
    $region17: #{tpu_custom_call.1} parent=1 // pred_fallthru
      _
    // Predicated region
    $region18: #{tpu_custom_call.1} parent=1 // pred_check
      _
    $region19: #{tpu_custom_call.1} parent=1 // pred_check_branch
      %21 = sbr.rel (0) target = $region21
    $region20: #{tpu_custom_call.1} parent=1 // pred_region
      %s23 = ssub.s32 128, 128
      %24 = vsyncadd [#allocation4], %s23
      %s26 = sshll.u32 [#allocation3], 4
      %s27 = int_to_ptr.vmem [resolvable:$true] %s26
      %29 = dma.hbm_to_vmem [thread:$0]  %s4, 128, %s27, [#allocation4]
    $region21: #{tpu_custom_call.1} parent=1 // pred_fallthru
      _
    // Predicated region
    $region22: #{tpu_custom_call.1} parent=1 // pred_check
      _
    $region23: #{tpu_custom_call.1} parent=1 // pred_check_branch
      %31 = sbr.rel (0) target = $region25
    $region24: #{tpu_custom_call.1} parent=1 // pred_region
      %32 = dma.done [#allocation4], 128
    $region25: #{tpu_custom_call.1} parent=1 // pred_fallthru
      _
    %p34 = scmp.eq.s32.totalorder 0, 0
    // Predicated region
    $region26: #{tpu_custom_call.1} parent=1 // pred_check
      %p35 = pneg %p34
    $region27: #{tpu_custom_call.1} parent=1 // pred_check_branch
      %37 = sbr.rel (%p35) target = $region29
    $region28: #{tpu_custom_call.1} parent=1 // pred_region
      %vm38 = vcmask 261120
      %39 = vst.msk [vmem:[#allocation2] sm:$0xff] %vm38, 0.0
      %40 = vst.msk [vmem:[#allocation2 + $0x8] sm:$0xff] %vm38, 0.0
    $region29: #{tpu_custom_call.1} parent=1 // pred_fallthru
      _
    %v41 = vld [vmem:[#allocation2] sm:$0xff]
    %v42 = vld [vmem:[#allocation2 + $0x8] sm:$0xff]
    %v43 = vld [vmem:[%s0] sm:$0xf]
    %v44 = vld [vmem:[%s0 + $0x4] sm:$0xf]
    %v45 = vld [vmem:[%s1] sm:$0xf]
    %v46 = vld [vmem:[%s1 + $0x4] sm:$0xf]
    %v47 = vld [vmem:[%s1 + $0x8] sm:$0xf]
    %v48 = vld [vmem:[%s1 + $0xc] sm:$0xf]
    %v51 = vunpack.c.l.b16 %v43
    %v52 = vunpack.c.l.b16 %v44
    %v53 = vpack.c.b16 %v52, %v51
    %v58 = vunpack.c.l.b16 %v45
    %v59 = vunpack.c.l.b16 %v46
    %v60 = vunpack.c.l.b16 %v47
    %v61 = vunpack.c.l.b16 %v48
    %v62 = vpack.c.b16 %v59, %v58
    %v63 = vpack.c.b16 %v61, %v60
    %vm66 = vcmask 261120
    %v68 = vsel %vm66, %v53, 0
    %70 = vmatprep.subr.bf16.mxu0 0
    %71 = vmatpush1.bf16.msra.mxu0 0
    %72 = vmatprep.subr.bf16.mxu0 0
    %73 = vmatpush1.bf16.msra.mxu0 0
    %74 = vmatprep.subr.bf16.mxu0 0
    %75 = vmatpush1.bf16.msra.mxu0 0
    %76 = vmatprep.subr.bf16.mxu0 0
    %77 = vmatpush1.bf16.msra.mxu0 0
    %78 = vmatprep.subr.bf16.mxu0 0
    %79 = vmatpush1.bf16.msra.mxu0 0
    %80 = vmatprep.subr.bf16.mxu0 0
    %81 = vmatpush1.bf16.msra.mxu0 0
    %82 = vmatprep.subr.bf16.mxu0 0
    %83 = vmatpush1.bf16.msra.mxu0 %v63
    %84 = vmatprep.subr.bf16.mxu0 0
    %85 = vmatpush1.bf16.msra.mxu0 %v62
    %86 = vmatprep.subr.bf16.mxu0 0
    %87 = vmatpush2.bf16.msra.mxu0 0
    %88 = vmatprep.subr.bf16.mxu0 0
    %89 = vmatpush2.bf16.msra.mxu0 0
    %90 = vmatprep.subr.bf16.mxu0 0
    %91 = vmatpush2.bf16.msra.mxu0 0
    %92 = vmatprep.subr.bf16.mxu0 0
    %93 = vmatpush2.bf16.msra.mxu0 0
    %94 = vmatprep.subr.bf16.mxu0 0
    %95 = vmatpush2.bf16.msra.mxu0 0
    %96 = vmatprep.subr.bf16.mxu0 0
    %97 = vmatpush2.bf16.msra.mxu0 0
    %98 = vmatprep.subr.bf16.mxu0 0
    %99 = vmatpush2.bf16.msra.mxu0 0
    %100 = vmatprep.subr.bf16.mxu0 0
    %101 = vmatpush2.bf16.msra.mxu0 0
    %102 = vmatprep.mubr.bf16.mxu0 0
    %103 = vmatmul.mubr.bf16.gmra.mxu0 %v68
    %v104 = vpop.f32.mrf.mxu0
    %v105 = vadd.f32 0.0, %v104
    %v106 = vpop.f32.mrf.mxu0
    %v107 = vpop.f32.mrf.mxu0
    %v108 = vadd.f32 0.0, %v107
    %v109 = vpop.f32.mrf.mxu0
    %110 = vdwg.mxu0
    %v111 = vadd.f32 %v41, %v105
    %v112 = vadd.f32 %v42, %v108
    %113 = vst.msk [vmem:[#allocation2] sm:$0xff] %vm66, %v111
    %114 = vst.msk [vmem:[#allocation2 + $0x8] sm:$0xff] %vm66, %v112
    // Predicated region
    $region30: #{tpu_custom_call.1} parent=1 // pred_check
      %p115 = pneg %p34
    $region31: #{tpu_custom_call.1} parent=1 // pred_check_branch
      %117 = sbr.rel (%p115) target = $region33
    $region32: #{tpu_custom_call.1} parent=1 // pred_region
      %v118 = vld [vmem:[%s3] sm:$0xff]
      %v119 = vld [vmem:[%s3 + $0x8] sm:$0xff]
      %v120 = vld [vmem:[#allocation3] sm:$0xff]
      %vm121 = vcmask 64512
      %v123 = vsel %vm121, %v118, 0
      %v126 = vsel %vm121, %v119, 0
      %128 = vmatprep.subr.mxu0 0.0
      %129 = vmatpush1.msra.mxu0 0.0
      %130 = vmatprep.subr.mxu0 0.0
      %131 = vmatpush1.msra.mxu0 0.0
      %132 = vmatprep.subr.mxu0 0.0
      %133 = vmatpush1.msra.mxu0 0.0
      %134 = vmatprep.subr.mxu0 0.0
      %135 = vmatpush1.msra.mxu0 0.0
      %136 = vmatprep.subr.mxu0 0.0
      %137 = vmatpush1.msra.mxu0 0.0
      %138 = vmatprep.subr.mxu0 0.0
      %139 = vmatpush1.msra.mxu0 0.0
      %140 = vmatprep.subr.mxu0 0.0
      %141 = vmatpush1.msra.mxu0 0.0
      %142 = vmatprep.subr.mxu0 0.0
      %143 = vmatpush1.msra.mxu0 0.0
      %144 = vmatprep.subr.mxu0 0.0
      %145 = vmatpush1.msra.mxu0 0.0
      %146 = vmatprep.subr.mxu0 0.0
      %147 = vmatpush1.msra.mxu0 0.0
      %148 = vmatprep.subr.mxu0 0.0
      %149 = vmatpush1.msra.mxu0 0.0
      %150 = vmatprep.subr.mxu0 0.0
      %151 = vmatpush1.msra.mxu0 0.0
      %152 = vmatprep.subr.mxu0 0.0
      %153 = vmatpush1.msra.mxu0 0.0
      %154 = vmatprep.subr.mxu0 0.0
      %155 = vmatpush1.msra.mxu0 0.0
      %156 = vmatprep.subr.mxu0 0.0
      %157 = vmatpush1.msra.mxu0 0.0
      %158 = vmatprep.subr.mxu0 0.0
      %159 = vmatpush1.msra.mxu0 %v120
      %160 = vmatprep.subr.mxu0 0.0
      %161 = vmatpush2.msra.mxu0 0.0
      %162 = vmatprep.subr.mxu0 0.0
      %163 = vmatpush2.msra.mxu0 0.0
      %164 = vmatprep.subr.mxu0 0.0
      %165 = vmatpush2.msra.mxu0 0.0
      %166 = vmatprep.subr.mxu0 0.0
      %167 = vmatpush2.msra.mxu0 0.0
      %168 = vmatprep.subr.mxu0 0.0
      %169 = vmatpush2.msra.mxu0 0.0
      %170 = vmatprep.subr.mxu0 0.0
      %171 = vmatpush2.msra.mxu0 0.0
      %172 = vmatprep.subr.mxu0 0.0
      %173 = vmatpush2.msra.mxu0 0.0
      %174 = vmatprep.subr.mxu0 0.0
      %175 = vmatpush2.msra.mxu0 0.0
      %176 = vmatprep.subr.mxu0 0.0
      %177 = vmatpush2.msra.mxu0 0.0
      %178 = vmatprep.subr.mxu0 0.0
      %179 = vmatpush2.msra.mxu0 0.0
      %180 = vmatprep.subr.mxu0 0.0
      %181 = vmatpush2.msra.mxu0 0.0
      %182 = vmatprep.subr.mxu0 0.0
      %183 = vmatpush2.msra.mxu0 0.0
      %184 = vmatprep.subr.mxu0 0.0
      %185 = vmatpush2.msra.mxu0 0.0
      %186 = vmatprep.subr.mxu0 0.0
      %187 = vmatpush2.msra.mxu0 0.0
      %188 = vmatprep.subr.mxu0 0.0
      %189 = vmatpush2.msra.mxu0 0.0
      %190 = vmatprep.subr.mxu0 0.0
      %191 = vmatpush2.msra.mxu0 0.0
      %192 = vmatprep.mubr.f32.mxu0 0.0
      %193 = vmatmul.mubr.f32.gmra.mxu0 %v123
      %v194 = vpop.f32.mrf.mxu0
      %v195 = vadd.f32 0.0, %v194
      %v196 = vpop.f32.mrf.mxu0
      %197 = vmatprep.mubr.f32.mxu0 0.0
      %198 = vmatmul.mubr.f32.gmra.mxu0 %v126
      %v199 = vpop.f32.mrf.mxu0
      %v200 = vadd.f32 0.0, %v199
      %v201 = vpop.f32.mrf.mxu0
      %202 = vdwg.mxu0
      %v203 = vld [vmem:[#allocation2] sm:$0xff]
      %v204 = vld [vmem:[#allocation2 + $0x8] sm:$0xff]
      %v205 = vld [vmem:[%s2] sm:$0x1]
      %v207 = vlaneseq
      %v208 = vshrl.u32 %v207, 7
      %v209 = vsub.s32 0, %v208
      %v210 = vrot.slane %v205, %v209
      %v212 = vadd.f32 %v203, %v210
      %v213 = vadd.f32 %v204, %v210
      %v214 = vadd.f32 %v212, %v195
      %v215 = vadd.f32 %v213, %v200
      %216 = vst.msk [vmem:[#allocation6] sm:$0xff] %vm66, %v214
      %217 = vst.msk [vmem:[#allocation6 + $0x8] sm:$0xff] %vm66, %v215
    $region33: #{tpu_custom_call.1} parent=1 // pred_fallthru
      _
    // Predicated region
    $region34: #{tpu_custom_call.1} parent=1 // pred_check
      _
    $region35: #{tpu_custom_call.1} parent=1 // pred_check_branch
      %219 = sbr.rel (0) target = $region37
    $region36: #{tpu_custom_call.1} parent=1 // pred_region
      %s221 = ssub.s32 256, 256
      %222 = vsyncadd [#allocation5], %s221
      %s223 = sshll.u32 [#allocation6], 4
      %s224 = int_to_ptr.vmem [resolvable:$true] %s223
      %229 = dma.vmem_to_hbm [thread:$0]  %s224, 256, %s5, [#allocation5], 128, 128, 8
    $region37: #{tpu_custom_call.1} parent=1 // pred_fallthru
      _
    // Predicated region
    $region38: #{tpu_custom_call.1} parent=1 // pred_check
      _
    $region39: #{tpu_custom_call.1} parent=1 // pred_check_branch
      %231 = sbr.rel (0) target = $region41
    $region40: #{tpu_custom_call.1} parent=1 // pred_region
      %232 = dma.done [#allocation5], 256
    $region41: #{tpu_custom_call.1} parent=1 // pred_fallthru
      _
    %233 = vsyncpa [#allocation4], 1
    %234 = vsyncpa [#allocation5], 1

</llo_original>
